<compile_context>
chip_gen: v6e
topology: v6e:2x2x1
jax: 0.10.0
libtpu: 0.0.40
codegen_flags: <defaults>
</compile_context>

<pallas_src>
import functools

import jax
import jax.numpy as jnp
import numpy as np
from jax import lax
from jax.experimental import pallas as pl
from jax.experimental.pallas import tpu as pltpu


def _round_up(x, m):
    return ((x + m - 1) // m) * m


def _mrfnet_kernel(ll_ref, valid_ref, wm_ref, bm_ref, wf_ref, bf_ref,
                   out_ref, stk_ref, *, Wp, num_iter, mix_w, neg_slope, inv_k):
    """Whole mean-field loop for the batch, resident in VMEM."""
    KP, N = out_ref.shape          # padded classes (sublane granule), padded lanes
    FP = bm_ref.shape[0]           # padded number of MRF filters

    # ---- iteration-invariant pieces (hoisted out of the mean-field loop) ----
    valid = valid_ref[...]                                   # (1, N) 1 on real pixels
    ll_b = ll_ref[...] + bf_ref[...]                         # (KP, N) ll + final bias
    wm = wm_ref[...]                                         # (FP, 9*KP) mxu dtype
    wf = wf_ref[...]                                         # (KP, FP)   mxu dtype
    bm_b = jnp.broadcast_to(bm_ref[...], (FP, N))            # (FP, N) MRF bias

    offsets = [(dy, dx) for dy in (-1, 0, 1) for dx in (-1, 0, 1)]

    # p starts at 1/K on real pixels, 0 on halo / dead lanes.
    p0 = jnp.full((KP, N), inv_k, jnp.float32) * valid

    def body(_, p):
        # Write the 9 shifted taps straight into the persistent scratch
        # (zero halo => no per-tap boundary masking needed).
        pc = p.astype(stk_ref.dtype)
        for t, (dy, dx) in enumerate(offsets):
            d = dy * Wp + dx
            rolled = pc if d == 0 else pltpu.roll(pc, shift=(-d) % N, axis=1)
            stk_ref[pl.ds(t * KP, KP), :] = rolled

        # 3x3 conv K->F as a single MXU matmul, + bias, LeakyReLU(0.2).
        h = jnp.dot(wm, stk_ref[...], preferred_element_type=jnp.float32) + bm_b
        h = jnp.where(h >= 0, h, neg_slope * h)               # (FP, N)

        # Final 1x1 conv F->K, add (ll + final bias).
        logits = ll_b + jnp.dot(wf, h.astype(wf.dtype),
                                preferred_element_type=jnp.float32)

        # Softmax over the class (sublane) axis; fold the halo re-zeroing into
        # the (1, N) reciprocal so the only extra cost is one (1,N) multiply.
        m = jnp.max(logits, axis=0, keepdims=True)
        e = jnp.exp(logits - m)
        s = jnp.sum(e, axis=0, keepdims=True)
        r = pl.reciprocal(s, approx=True)                     # EUP
        r = r * (2.0 - s * r)                                 # one Newton step
        pnew = e * (r * valid)

        if mix_w == 1.0:                                      # trace-time specialization
            return pnew
        return mix_w * pnew + (1.0 - mix_w) * p

    out_ref[...] = lax.fori_loop(0, num_iter, body, p0)


def mrfnet_forward(resp, params, *, num_iter=10, w=1.0, neg_slope=0.2,
                   mxu_dtype=jnp.bfloat16):
    """resp: (B, K, H, W) NCHW float tensor (log-likelihoods)."""
    if num_iter < 1:
        raise ValueError("num_iter must be >= 1")
    B, K, H, W = resp.shape
    w_mrf, b_mrf, w_fin, b_fin = params
    F = w_mrf.shape[0]

    mxu_dtype = np.dtype(mxu_dtype)
    granule = 8 * (4 // mxu_dtype.itemsize)   # 8 for f32, 16 for bf16
    KP = _round_up(K, granule)
    FP = _round_up(F, granule)

    Hp, Wp = H + 2, W + 2                     # zero 1-pixel halo per image
    Sp = Hp * Wp
    N = _round_up(B * Sp, 128)                # lane-dense padded lane count

    NEG = -1e30
    ll = resp.astype(jnp.float32)
    # Padded classes get -1e30 log-likelihood -> softmax weight exactly 0.
    ll = jnp.pad(ll, ((0, 0), (0, KP - K), (0, 0), (0, 0)), constant_values=NEG)
    ll = jnp.pad(ll, ((0, 0), (0, 0), (1, 1), (1, 1)))        # zero halo
    ll = jnp.transpose(ll, (1, 0, 2, 3)).reshape(KP, B * Sp)  # lane = b*Sp + r*Wp + c
    ll = jnp.pad(ll, ((0, 0), (0, N - B * Sp)))               # dead trailing lanes

    valid2d = jnp.zeros((Hp, Wp), jnp.float32).at[1:H + 1, 1:W + 1].set(1.0)
    valid = jnp.tile(valid2d.reshape(-1), B)
    valid = jnp.pad(valid, (0, N - B * Sp)).reshape(1, N)

    # (F, K, 3, 3) -> (FP, 9*KP), columns tap-major: col = ((dy+1)*3+(dx+1))*KP + k.
    wm = jnp.zeros((FP, 3, 3, KP), jnp.float32)
    wm = wm.at[:F, :, :, :K].set(
        jnp.transpose(w_mrf.astype(jnp.float32), (0, 2, 3, 1)))
    wm = wm.reshape(FP, 9 * KP).astype(mxu_dtype)

    bm = jnp.zeros((FP, 1), jnp.float32).at[:F, 0].set(b_mrf.astype(jnp.float32))
    wf = jnp.zeros((KP, FP), jnp.float32).at[:K, :F].set(
        w_fin[:, :, 0, 0].astype(jnp.float32)).astype(mxu_dtype)
    bf = jnp.zeros((KP, 1), jnp.float32).at[:K, 0].set(b_fin.astype(jnp.float32))

    # ---- VMEM budget: whole-problem-resident design; fail loudly if too big.
    est = (4 * N * (2 * KP + 2 * 1 + 2 * KP)          # ll / valid / out (double-buffered)
           + 9 * KP * N * mxu_dtype.itemsize          # stacked tap scratch
           + 4 * N * (3 * KP + 2 * FP)                # loop-live temporaries headroom
           + 8 * (FP * 9 * KP + KP * FP + FP + KP))   # weights / biases
    try:
        cap = int(getattr(pltpu.get_tpu_info(), "vmem_capacity_bytes",
                          64 * 1024 * 1024))
    except Exception:
        cap = 64 * 1024 * 1024                        # conservative (v7x per-TC)
    budget = int(0.65 * cap)
    if est > budget:
        # TODO(synk): dispatch to a spatially tiled / HBM-streaming variant here.
        raise ValueError(
            f"MRFNet whole-image-resident kernel needs ~{est} B VMEM "
            f"(budget {budget} B); spatial tiling not implemented.")
    vmem_limit = int(min(budget, max(2 * est, 16 * 1024 * 1024)))

    flops = num_iter * (2 * FP * (9 * KP) * N + 2 * KP * FP * N)
    cost = pl.CostEstimate(
        flops=int(flops),
        transcendentals=int(num_iter * KP * N),
        bytes_accessed=int(4 * (2 * KP * N + N + FP * 9 * KP + KP * FP + FP + KP)))

    kernel = functools.partial(
        _mrfnet_kernel, Wp=Wp, num_iter=int(num_iter),
        mix_w=float(w), neg_slope=float(neg_slope), inv_k=1.0 / K)

    out = pl.pallas_call(
        kernel,
        out_shape=jax.ShapeDtypeStruct((KP, N), jnp.float32),
        grid_spec=pltpu.PrefetchScalarGridSpec(
            num_scalar_prefetch=0,
            grid=(1,),
            in_specs=[
                pl.BlockSpec((KP, N), lambda i: (0, 0)),       # ll (padded + halo'd)
                pl.BlockSpec((1, N), lambda i: (0, 0)),        # valid-pixel mask
                pl.BlockSpec((FP, 9 * KP), lambda i: (0, 0)),  # stacked 3x3 weights
                pl.BlockSpec((FP, 1), lambda i: (0, 0)),       # MRF conv bias
                pl.BlockSpec((KP, FP), lambda i: (0, 0)),      # final 1x1 weights
                pl.BlockSpec((KP, 1), lambda i: (0, 0)),       # final 1x1 bias
            ],
            out_specs=pl.BlockSpec((KP, N), lambda i: (0, 0)),
            scratch_shapes=[pltpu.VMEM((9 * KP, N), mxu_dtype)],
        ),
        compiler_params=pltpu.CompilerParams(
            dimension_semantics=("arbitrary",),
            vmem_limit_bytes=vmem_limit),
        cost_estimate=cost,
    )(ll, valid, wm, bm, wf, bf)

    out = out[:K, :B * Sp].reshape(K, B, Hp, Wp)[:, :, 1:H + 1, 1:W + 1]
    return jnp.transpose(out, (1, 0, 2, 3))


def init_params(key, num_classes, kernel_size=3):
    """Deterministic Kaiming-uniform-style init (shapes match the torch module)."""
    F = min(num_classes ** 2, 64)
    k1, k2, k3, k4 = jax.random.split(key, 4)
    bound1 = 1.0 / np.sqrt(num_classes * kernel_size ** 2)
    w_mrf = jax.random.uniform(k1, (F, num_classes, kernel_size, kernel_size),
                               jnp.float32, -bound1, bound1)
    b_mrf = jax.random.uniform(k2, (F,), jnp.float32, -bound1, bound1)
    bound2 = 1.0 / np.sqrt(F)
    w_fin = jax.random.uniform(k3, (num_classes, F, 1, 1),
                               jnp.float32, -bound2, bound2)
    b_fin = jax.random.uniform(k4, (num_classes,), jnp.float32, -bound2, bound2)
    return w_mrf, b_mrf, w_fin, b_fin


def mrfnet_reference(resp, params, *, num_iter=10, w=1.0, neg_slope=0.2):
    """Pure-JAX reference of the same forward pass (for verification)."""
    w_mrf, b_mrf, w_fin, b_fin = params
    ll = resp.astype(jnp.float32)
    K = ll.shape[1]
    p = jnp.full_like(ll, 1.0 / K)
    for _ in range(num_iter):
        op = p
        h = lax.conv_general_dilated(p, w_mrf, (1, 1), [(1, 1), (1, 1)],
                                     dimension_numbers=('NCHW', 'OIHW', 'NCHW'))
        h = h + b_mrf[None, :, None, None]
        h = jnp.where(h >= 0, h, neg_slope * h)
        o = lax.conv_general_dilated(h, w_fin, (1, 1), [(0, 0), (0, 0)],
                                     dimension_numbers=('NCHW', 'OIHW', 'NCHW'))
        o = o + b_fin[None, :, None, None]
        p = jax.nn.softmax(ll + o, axis=1)
        p = w * p + (1.0 - w) * op
    return p


# TODO(synk): training-only pieces (zero_grad_centre gradient hook, random
# num_iter, augmentation, loss/metric bookkeeping) have no forward-pass /
# Pallas equivalent and are intentionally not implemented.

if __name__ == "__main__":
    B, K, H, W = 2, 4, 16, 16          # dim=2, num_classes=4
    NUM_ITER, MIX_W = 10, 1.0          # module defaults

    key = jax.random.PRNGKey(0)
    k_in, k_par = jax.random.split(key)
    resp = jax.random.normal(k_in, (B, K, H, W), jnp.float32)
    params = init_params(k_par, K)

    ref = jax.block_until_ready(
        mrfnet_reference(resp, params, num_iter=NUM_ITER, w=MIX_W))

    # Strict check with f32 MXU operands.
    out_f32 = jax.block_until_ready(
        mrfnet_forward(resp, params, num_iter=NUM_ITER, w=MIX_W,
                       mxu_dtype=jnp.float32))
    np.testing.assert_allclose(np.asarray(out_f32), np.asarray(ref),
                               rtol=2e-3, atol=2e-3)

    # Fast path (bf16 MXU operands, f32 accumulation / softmax): looser check.
    out_bf16 = jax.block_until_ready(
        mrfnet_forward(resp, params, num_iter=NUM_ITER, w=MIX_W,
                       mxu_dtype=jnp.bfloat16))
    np.testing.assert_allclose(np.asarray(out_bf16), np.asarray(ref),
                               rtol=2e-2, atol=2e-2)

    print("KERNEL_OK")
</pallas_src>

<mosaic_0001>
module attributes {stable_mosaic.version = 11 : i64} {
  func.func @_mrfnet_kernel(%arg0: i32, %arg1: memref<8x768xf32, #tpu.memory_space<vmem>>, %arg2: memref<1x768xf32, #tpu.memory_space<vmem>>, %arg3: memref<16x72xf32, #tpu.memory_space<vmem>>, %arg4: memref<16x1xf32, #tpu.memory_space<vmem>>, %arg5: memref<8x16xf32, #tpu.memory_space<vmem>>, %arg6: memref<8x1xf32, #tpu.memory_space<vmem>>, %arg7: memref<8x768xf32, #tpu.memory_space<vmem>>, %arg8: memref<72x768xf32, #tpu.memory_space<vmem>>) attributes {dimension_semantics = [#tpu.dimension_semantics<arbitrary>], iteration_bounds = array<i64: 1>, scalar_prefetch = 0 : i64, scratch_operands = 1 : i64, tpu.core_type = #tpu.core_type<tc>, window_params = [{pipeline_mode = #tpu.pipeline_mode<synchronous>, transform_indices = @transform_0, window_bounds = array<i64: 8, 768>}, {pipeline_mode = #tpu.pipeline_mode<synchronous>, transform_indices = @transform_1, window_bounds = array<i64: 1, 768>}, {pipeline_mode = #tpu.pipeline_mode<synchronous>, transform_indices = @transform_2, window_bounds = array<i64: 16, 72>}, {pipeline_mode = #tpu.pipeline_mode<synchronous>, transform_indices = @transform_3, window_bounds = array<i64: 16, 1>}, {pipeline_mode = #tpu.pipeline_mode<synchronous>, transform_indices = @transform_4, window_bounds = array<i64: 8, 16>}, {pipeline_mode = #tpu.pipeline_mode<synchronous>, transform_indices = @transform_5, window_bounds = array<i64: 8, 1>}, {pipeline_mode = #tpu.pipeline_mode<synchronous>, transform_indices = @transform_6, window_bounds = array<i64: 8, 768>}]} {
    %c0 = arith.constant 0 : index
    %c0_0 = arith.constant 0 : index
    %0 = vector.load %arg2[%c0, %c0_0] : memref<1x768xf32, #tpu.memory_space<vmem>>, vector<1x768xf32>
    %c0_1 = arith.constant 0 : index
    %c0_2 = arith.constant 0 : index
    %1 = vector.load %arg1[%c0_1, %c0_2] : memref<8x768xf32, #tpu.memory_space<vmem>>, vector<8x768xf32>
    %c0_3 = arith.constant 0 : index
    %c0_4 = arith.constant 0 : index
    %2 = vector.load %arg6[%c0_3, %c0_4] : memref<8x1xf32, #tpu.memory_space<vmem>>, vector<8x1xf32>
    %3 = vector.broadcast %2 : vector<8x1xf32> to vector<8x768xf32>
    %4 = arith.addf %1, %3 : vector<8x768xf32>
    %c0_5 = arith.constant 0 : index
    %c0_6 = arith.constant 0 : index
    %5 = vector.load %arg3[%c0_5, %c0_6] : memref<16x72xf32, #tpu.memory_space<vmem>>, vector<16x72xf32>
    %c0_7 = arith.constant 0 : index
    %c0_8 = arith.constant 0 : index
    %6 = vector.load %arg5[%c0_7, %c0_8] : memref<8x16xf32, #tpu.memory_space<vmem>>, vector<8x16xf32>
    %c0_9 = arith.constant 0 : index
    %c0_10 = arith.constant 0 : index
    %7 = vector.load %arg4[%c0_9, %c0_10] : memref<16x1xf32, #tpu.memory_space<vmem>>, vector<16x1xf32>
    %8 = vector.shape_cast %7 : vector<16x1xf32> to vector<16x1xf32>
    %9 = vector.broadcast %8 : vector<16x1xf32> to vector<16x768xf32>
    %cst = arith.constant 2.500000e-01 : f32
    %10 = vector.broadcast %cst : f32 to vector<8x768xf32>
    %11 = vector.broadcast %0 : vector<1x768xf32> to vector<8x768xf32>
    %12 = arith.mulf %10, %11 : vector<8x768xf32>
    %c0_i32 = arith.constant 0 : i32
    %c10_i32 = arith.constant 10 : i32
    %13 = arith.addi %c0_i32, %c10_i32 : i32
    %c1_i32 = arith.constant 1 : i32
    %14 = scf.for %arg9 = %c0_i32 to %13 step %c1_i32 iter_args(%arg10 = %12) -> (vector<8x768xf32>)  : i32 {
      %c19_i32 = arith.constant 19 : i32
      %16 = tpu.dynamic_rotate %arg10 by %c19_i32 dim 1 : vector<8x768xf32>, i32 -> vector<8x768xf32>
      %c0_13 = arith.constant 0 : index
      %c0_14 = arith.constant 0 : index
      %17 = vector.load %arg8[%c0_13, %c0_14] : memref<72x768xf32, #tpu.memory_space<vmem>>, vector<8x768xf32>
      tpu.vector_store %arg8[%c0_13, %c0_14], %16 {strides = array<i32>} : memref<72x768xf32, #tpu.memory_space<vmem>>, vector<8x768xf32>,
      %c18_i32 = arith.constant 18 : i32
      %18 = tpu.dynamic_rotate %arg10 by %c18_i32 dim 1 : vector<8x768xf32>, i32 -> vector<8x768xf32>
      %c8 = arith.constant 8 : index
      %c0_15 = arith.constant 0 : index
      %19 = vector.load %arg8[%c8, %c0_15] : memref<72x768xf32, #tpu.memory_space<vmem>>, vector<8x768xf32>
      tpu.vector_store %arg8[%c8, %c0_15], %18 {strides = array<i32>} : memref<72x768xf32, #tpu.memory_space<vmem>>, vector<8x768xf32>,
      %c17_i32 = arith.constant 17 : i32
      %20 = tpu.dynamic_rotate %arg10 by %c17_i32 dim 1 : vector<8x768xf32>, i32 -> vector<8x768xf32>
      %c16 = arith.constant 16 : index
      %c0_16 = arith.constant 0 : index
      %21 = vector.load %arg8[%c16, %c0_16] : memref<72x768xf32, #tpu.memory_space<vmem>>, vector<8x768xf32>
      tpu.vector_store %arg8[%c16, %c0_16], %20 {strides = array<i32>} : memref<72x768xf32, #tpu.memory_space<vmem>>, vector<8x768xf32>,
      %c1_i32_17 = arith.constant 1 : i32
      %22 = tpu.dynamic_rotate %arg10 by %c1_i32_17 dim 1 : vector<8x768xf32>, i32 -> vector<8x768xf32>
      %c24 = arith.constant 24 : index
      %c0_18 = arith.constant 0 : index
      %23 = vector.load %arg8[%c24, %c0_18] : memref<72x768xf32, #tpu.memory_space<vmem>>, vector<8x768xf32>
      tpu.vector_store %arg8[%c24, %c0_18], %22 {strides = array<i32>} : memref<72x768xf32, #tpu.memory_space<vmem>>, vector<8x768xf32>,
      %c32 = arith.constant 32 : index
      %c0_19 = arith.constant 0 : index
      %24 = vector.load %arg8[%c32, %c0_19] : memref<72x768xf32, #tpu.memory_space<vmem>>, vector<8x768xf32>
      tpu.vector_store %arg8[%c32, %c0_19], %arg10 {strides = array<i32>} : memref<72x768xf32, #tpu.memory_space<vmem>>, vector<8x768xf32>,
      %c767_i32 = arith.constant 767 : i32
      %25 = tpu.dynamic_rotate %arg10 by %c767_i32 dim 1 : vector<8x768xf32>, i32 -> vector<8x768xf32>
      %c40 = arith.constant 40 : index
      %c0_20 = arith.constant 0 : index
      %26 = vector.load %arg8[%c40, %c0_20] : memref<72x768xf32, #tpu.memory_space<vmem>>, vector<8x768xf32>
      tpu.vector_store %arg8[%c40, %c0_20], %25 {strides = array<i32>} : memref<72x768xf32, #tpu.memory_space<vmem>>, vector<8x768xf32>,
      %c751_i32 = arith.constant 751 : i32
      %27 = tpu.dynamic_rotate %arg10 by %c751_i32 dim 1 : vector<8x768xf32>, i32 -> vector<8x768xf32>
      %c48 = arith.constant 48 : index
      %c0_21 = arith.constant 0 : index
      %28 = vector.load %arg8[%c48, %c0_21] : memref<72x768xf32, #tpu.memory_space<vmem>>, vector<8x768xf32>
      tpu.vector_store %arg8[%c48, %c0_21], %27 {strides = array<i32>} : memref<72x768xf32, #tpu.memory_space<vmem>>, vector<8x768xf32>,
      %c750_i32 = arith.constant 750 : i32
      %29 = tpu.dynamic_rotate %arg10 by %c750_i32 dim 1 : vector<8x768xf32>, i32 -> vector<8x768xf32>
      %c56 = arith.constant 56 : index
      %c0_22 = arith.constant 0 : index
      %30 = vector.load %arg8[%c56, %c0_22] : memref<72x768xf32, #tpu.memory_space<vmem>>, vector<8x768xf32>
      tpu.vector_store %arg8[%c56, %c0_22], %29 {strides = array<i32>} : memref<72x768xf32, #tpu.memory_space<vmem>>, vector<8x768xf32>,
      %c749_i32 = arith.constant 749 : i32
      %31 = tpu.dynamic_rotate %arg10 by %c749_i32 dim 1 : vector<8x768xf32>, i32 -> vector<8x768xf32>
      %c64 = arith.constant 64 : index
      %c0_23 = arith.constant 0 : index
      %32 = vector.load %arg8[%c64, %c0_23] : memref<72x768xf32, #tpu.memory_space<vmem>>, vector<8x768xf32>
      tpu.vector_store %arg8[%c64, %c0_23], %31 {strides = array<i32>} : memref<72x768xf32, #tpu.memory_space<vmem>>, vector<8x768xf32>,
      %c0_24 = arith.constant 0 : index
      %c0_25 = arith.constant 0 : index
      %33 = vector.load %arg8[%c0_24, %c0_25] : memref<72x768xf32, #tpu.memory_space<vmem>>, vector<72x768xf32>
      %cst_26 = arith.constant dense<0.000000e+00> : vector<16x768xf32>
      %34 = tpu.matmul %5, %33, %cst_26 {dimension_numbers = #tpu.dot_dimension_numbers<[1], [0], [0], [1], [0, 0, 1, 1], [], []>} : vector<16x72xf32>, vector<72x768xf32>, vector<16x768xf32> -> vector<16x768xf32>
      %35 = arith.addf %34, %9 : vector<16x768xf32>
      %cst_27 = arith.constant 0.000000e+00 : f32
      %36 = vector.broadcast %cst_27 : f32 to vector<16x768xf32>
      %37 = arith.cmpf oge, %35, %36 : vector<16x768xf32>
      %cst_28 = arith.constant 2.000000e-01 : f32
      %38 = vector.broadcast %cst_28 : f32 to vector<16x768xf32>
      %39 = arith.mulf %38, %35 : vector<16x768xf32>
      %40 = arith.select %37, %35, %39 : vector<16x768xi1>, vector<16x768xf32>
      %cst_29 = arith.constant dense<0.000000e+00> : vector<8x768xf32>
      %41 = tpu.matmul %6, %40, %cst_29 {dimension_numbers = #tpu.dot_dimension_numbers<[1], [0], [0], [1], [0, 0, 1, 1], [], []>} : vector<8x16xf32>, vector<16x768xf32>, vector<8x768xf32> -> vector<8x768xf32>
      %42 = arith.addf %4, %41 : vector<8x768xf32>
      %cst_30 = arith.constant dense<0xFF800000> : vector<768xf32>
      %43 = vector.multi_reduction <maximumf>, %42, %cst_30 [0] : vector<8x768xf32> to vector<768xf32>
      %44 = vector.shape_cast %43 : vector<768xf32> to vector<1x768xf32>
      %45 = vector.broadcast %44 : vector<1x768xf32> to vector<8x768xf32>
      %46 = arith.subf %42, %45 : vector<8x768xf32>
      %47 = math.exp %46 : vector<8x768xf32>
      %cst_31 = arith.constant dense<0.000000e+00> : vector<768xf32>
      %48 = vector.multi_reduction <add>, %47, %cst_31 [0] : vector<8x768xf32> to vector<768xf32>
      %49 = vector.shape_cast %48 : vector<768xf32> to vector<1x768xf32>
      %50 = tpu.reciprocal %49 {approx = true} : vector<1x768xf32> -> vector<1x768xf32>
      %51 = arith.mulf %49, %50 : vector<1x768xf32>
      %cst_32 = arith.constant 2.000000e+00 : f32
      %52 = vector.broadcast %cst_32 : f32 to vector<1x768xf32>
      %53 = arith.subf %52, %51 : vector<1x768xf32>
      %54 = arith.mulf %50, %53 : vector<1x768xf32>
      %55 = arith.mulf %54, %0 : vector<1x768xf32>
      %56 = vector.broadcast %55 : vector<1x768xf32> to vector<8x768xf32>
      %57 = arith.mulf %47, %56 : vector<8x768xf32>
      scf.yield %57 : vector<8x768xf32>
    }
    %c0_11 = arith.constant 0 : index
    %c0_12 = arith.constant 0 : index
    %15 = vector.load %arg7[%c0_11, %c0_12] : memref<8x768xf32, #tpu.memory_space<vmem>>, vector<8x768xf32>
    tpu.vector_store %arg7[%c0_11, %c0_12], %14 {strides = array<i32>} : memref<8x768xf32, #tpu.memory_space<vmem>>, vector<8x768xf32>,
    return
  }
  func.func @transform_0(%arg0: i32) -> (i32, i32) {
    %c0_i32 = arith.constant 0 : i32
    %c0_i32_0 = arith.constant 0 : i32
    %c0_i32_1 = arith.constant 0 : i32
    return %c0_i32, %c0_i32_0 : i32, i32
  }
  func.func @transform_1(%arg0: i32) -> (i32, i32) {
    %c0_i32 = arith.constant 0 : i32
    %c0_i32_0 = arith.constant 0 : i32
    %c0_i32_1 = arith.constant 0 : i32
    return %c0_i32, %c0_i32_0 : i32, i32
  }
  func.func @transform_2(%arg0: i32) -> (i32, i32) {
    %c0_i32 = arith.constant 0 : i32
    %c0_i32_0 = arith.constant 0 : i32
    %c0_i32_1 = arith.constant 0 : i32
    return %c0_i32, %c0_i32_0 : i32, i32
  }
  func.func @transform_3(%arg0: i32) -> (i32, i32) {
    %c0_i32 = arith.constant 0 : i32
    %c0_i32_0 = arith.constant 0 : i32
    %c0_i32_1 = arith.constant 0 : i32
    return %c0_i32, %c0_i32_0 : i32, i32
  }
  func.func @transform_4(%arg0: i32) -> (i32, i32) {
    %c0_i32 = arith.constant 0 : i32
    %c0_i32_0 = arith.constant 0 : i32
    %c0_i32_1 = arith.constant 0 : i32
    return %c0_i32, %c0_i32_0 : i32, i32
  }
  func.func @transform_5(%arg0: i32) -> (i32, i32) {
    %c0_i32 = arith.constant 0 : i32
    %c0_i32_0 = arith.constant 0 : i32
    %c0_i32_1 = arith.constant 0 : i32
    return %c0_i32, %c0_i32_0 : i32, i32
  }
  func.func @transform_6(%arg0: i32) -> (i32, i32) {
    %c0_i32 = arith.constant 0 : i32
    %c0_i32_0 = arith.constant 0 : i32
    %c0_i32_1 = arith.constant 0 : i32
    return %c0_i32, %c0_i32_0 : i32, i32
  }
}

</mosaic_0001>

<llo_original>
// kernel: tpu_custom_call.1
$region0: #{tpu_custom_call.1}
  #allocation0 [shape = 'u32[]', space=smem, size = 0x4, offset = 0x4, fixed_abs, tag = 'smem constant byte address 0x4 - core index']
  #allocation1 [shape = 'u32[144,128]{1,0:T(1,128)}', space=vmem, size = 0x12000, scoped, tag = 'internal scratch']
  #allocation2 [shape = 'f32[72,768]{1,0:T(8,128)}', space=vmem, size = 0x36000, scoped, tag = 'scratch operand']
  %s0 = inlined_call_operand.hbm [shape: f32[8,768], index: 0, kind: input, shape index: {}]
  %s1 = inlined_call_operand.hbm [shape: f32[1,768], index: 1, kind: input, shape index: {}]
  %s2 = inlined_call_operand.vmem [shape: f32[16,72], index: 2, kind: input, shape index: {}]
  %s3 = inlined_call_operand.vmem [shape: f32[16,1], index: 3, kind: input, shape index: {}]
  %s4 = inlined_call_operand.vmem [shape: f32[8,16], index: 4, kind: input, shape index: {}]
  %s5 = inlined_call_operand.vmem [shape: f32[8,1], index: 5, kind: input, shape index: {}]
  %s6 = inlined_call_operand.hbm [shape: f32[8,768], index: 6, kind: output, shape index: {}]
  %s7 = sld [smem:[#allocation0]]
  $region49: #{tpu_custom_call.1} parent=0
    _
  %s9 = ssub.s32 1, %s7
  %s10 = scalar_select 0, %s9, %s7
  $region1: #{tpu_custom_call.1} parent=0
    #allocation3 [shape = 'u8[24576]{0}', space=vmem, size = 0x6000, scoped, tag = 'input window, operand 0, single buffered']
    #allocation4 [shape = 's32[1]{0}', space=sflag, size = 0x4, scoped, tag = 'scoped memory for tpu_custom_call.1']
    #allocation5 [shape = 's32[1]{0}', space=sflag, size = 0x4, scoped, tag = 'scoped memory for tpu_custom_call.1']
    #allocation6 [shape = 'u8[3072]{0}', space=vmem, size = 0xc00, scoped, tag = 'input window, operand 1, single buffered']
    #allocation7 [shape = 's32[1]{0}', space=sflag, size = 0x4, scoped, tag = 'scoped memory for tpu_custom_call.1']
    #allocation8 [shape = 'u8[24576]{0}', space=vmem, size = 0x6000, scoped, tag = 'output window, operand 0, single buffered']
    %11 = vsyncpa [#allocation4], 0
    %12 = vsyncpa [#allocation7], 0
    %13 = vsyncpa [#allocation5], 0
    // Predicated region
    $region2: #{tpu_custom_call.1} parent=1 // pred_check
      _
    $region3: #{tpu_custom_call.1} parent=1 // pred_check_branch
      %15 = sbr.rel (0) target = $region5
    $region4: #{tpu_custom_call.1} parent=1 // pred_region
      %s17 = ssub.s32 768, 768
      %18 = vsyncadd [#allocation4], %s17
      %s20 = sshll.u32 [#allocation3], 4
      %s21 = int_to_ptr.vmem [resolvable:$true] %s20
      %23 = dma.hbm_to_vmem [thread:$0]  %s0, 768, %s21, [#allocation4]
    $region5: #{tpu_custom_call.1} parent=1 // pred_fallthru
      _
    // Predicated region
    $region6: #{tpu_custom_call.1} parent=1 // pred_check
      _
    $region7: #{tpu_custom_call.1} parent=1 // pred_check_branch
      %25 = sbr.rel (0) target = $region9
    $region8: #{tpu_custom_call.1} parent=1 // pred_region
      %s27 = ssub.s32 96, 96
      %28 = vsyncadd [#allocation7], %s27
      %s30 = sshll.u32 [#allocation6], 4
      %s31 = int_to_ptr.vmem [resolvable:$true] %s30
      %33 = dma.hbm_to_vmem [thread:$0]  %s1, 96, %s31, [#allocation7]
    $region9: #{tpu_custom_call.1} parent=1 // pred_fallthru
      _
    // Predicated region
    $region10: #{tpu_custom_call.1} parent=1 // pred_check
      _
    $region11: #{tpu_custom_call.1} parent=1 // pred_check_branch
      %35 = sbr.rel (0) target = $region13
    $region12: #{tpu_custom_call.1} parent=1 // pred_region
      _
    $region13: #{tpu_custom_call.1} parent=1 // pred_fallthru
      _
    // Predicated region
    $region14: #{tpu_custom_call.1} parent=1 // pred_check
      _
    $region15: #{tpu_custom_call.1} parent=1 // pred_check_branch
      %37 = sbr.rel (0) target = $region17
    $region16: #{tpu_custom_call.1} parent=1 // pred_region
      _
    $region17: #{tpu_custom_call.1} parent=1 // pred_fallthru
      _
    // Predicated region
    $region18: #{tpu_custom_call.1} parent=1 // pred_check
      _
    $region19: #{tpu_custom_call.1} parent=1 // pred_check_branch
      %39 = sbr.rel (0) target = $region21
    $region20: #{tpu_custom_call.1} parent=1 // pred_region
      _
    $region21: #{tpu_custom_call.1} parent=1 // pred_fallthru
      _
    // Predicated region
    $region22: #{tpu_custom_call.1} parent=1 // pred_check
      _
    $region23: #{tpu_custom_call.1} parent=1 // pred_check_branch
      %41 = sbr.rel (0) target = $region25
    $region24: #{tpu_custom_call.1} parent=1 // pred_region
      _
    $region25: #{tpu_custom_call.1} parent=1 // pred_fallthru
      _
    // Predicated region
    $region26: #{tpu_custom_call.1} parent=1 // pred_check
      _
    $region27: #{tpu_custom_call.1} parent=1 // pred_check_branch
      %43 = sbr.rel (0) target = $region29
    $region28: #{tpu_custom_call.1} parent=1 // pred_region
      %44 = dma.done [#allocation4], 768
    $region29: #{tpu_custom_call.1} parent=1 // pred_fallthru
      _
    // Predicated region
    $region30: #{tpu_custom_call.1} parent=1 // pred_check
      _
    $region31: #{tpu_custom_call.1} parent=1 // pred_check_branch
      %46 = sbr.rel (0) target = $region33
    $region32: #{tpu_custom_call.1} parent=1 // pred_region
      %47 = dma.done [#allocation7], 96
    $region33: #{tpu_custom_call.1} parent=1 // pred_fallthru
      _
    %v48 = vld [vmem:[#allocation6] sm:$0x3f]
    %v49 = vld [vmem:[#allocation3] sm:$0xff]
    %v50 = vld [vmem:[#allocation3 + $0x8] sm:$0xff]
    %v51 = vld [vmem:[#allocation3 + $0x10] sm:$0xff]
    %v52 = vld [vmem:[#allocation3 + $0x18] sm:$0xff]
    %v53 = vld [vmem:[#allocation3 + $0x20] sm:$0xff]
    %v54 = vld [vmem:[#allocation3 + $0x28] sm:$0xff]
    %v55 = vld [vmem:[%s5] sm:$0xff]
    %57 = vset.pattern.permute.xlu0 0
    %58 = vperm.xlu0 %57, %v55
    %v59 = vpop.permute.xlu0 %58
    %v61 = vadd.f32 %v49, %v59
    %v62 = vadd.f32 %v50, %v59
    %v63 = vadd.f32 %v51, %v59
    %v64 = vadd.f32 %v52, %v59
    %v65 = vadd.f32 %v53, %v59
    %v66 = vadd.f32 %v54, %v59
    %v67 = vld [vmem:[%s2] sm:$0xff]
    %v68 = vld [vmem:[%s2 + $0x8] sm:$0xff]
    %v69 = vld [vmem:[%s4] sm:$0xff]
    %v70 = vld [vmem:[%s3] sm:$0xff]
    %v71 = vld [vmem:[%s3 + $0x8] sm:$0xff]
    %73 = vset.pattern.permute.xlu0 0
    %74 = vperm.xlu0 %73, %v70
    %v75 = vpop.permute.xlu0 %74
    %78 = vset.pattern.permute.xlu0 0
    %79 = vperm.xlu0 %78, %v71
    %v80 = vpop.permute.xlu0 %79
    %v83 = vlaneseq
    %v84 = vshrl.u32 %v83, 7
    %v85 = vsub.s32 0, %v84
    %v86 = vrot.slane %v48, %v85
    %v87 = vlaneseq
    %v88 = vshrl.u32 %v87, 7
    %v89 = vsub.s32 1, %v88
    %v90 = vrot.slane %v48, %v89
    %v91 = vlaneseq
    %v92 = vshrl.u32 %v91, 7
    %v93 = vsub.s32 2, %v92
    %v94 = vrot.slane %v48, %v93
    %v95 = vlaneseq
    %v96 = vshrl.u32 %v95, 7
    %v97 = vsub.s32 3, %v96
    %v98 = vrot.slane %v48, %v97
    %v99 = vlaneseq
    %v100 = vshrl.u32 %v99, 7
    %v101 = vsub.s32 4, %v100
    %v102 = vrot.slane %v48, %v101
    %v103 = vlaneseq
    %v104 = vshrl.u32 %v103, 7
    %v105 = vsub.s32 5, %v104
    %v106 = vrot.slane %v48, %v105
    %v113 = vmul.f32 %v86, 0.25
    %v114 = vmul.f32 %v90, 0.25
    %v115 = vmul.f32 %v94, 0.25
    %v116 = vmul.f32 %v98, 0.25
    %v117 = vmul.f32 %v102, 0.25
    %v118 = vmul.f32 %v106, 0.25
    loop: start=0, step=1, limit=10
    $region34: #{tpu_custom_call.1} parent=1 // loop_pre_header
      _
    $region35: #{tpu_custom_call.1} parent=1 // loop_header
      %s120 = sphi 0, %s124
      %p121 = scmp.ge.s32.totalorder %s120, 10
      %v125 = vphi %v113, %v1034
      %v126 = vphi %v114, %v1035
      %v127 = vphi %v115, %v1036
      %v128 = vphi %v116, %v1037
      %v129 = vphi %v117, %v1038
      %v130 = vphi %v118, %v1039
    $region36: #{tpu_custom_call.1} parent=1 // loop_header_branch
      %123 = sbr.rel (%p121) target = $region40
    $region37: #{tpu_custom_call.1} parent=1 // loop_body
      %131 = vrot.lane.b32.xlu0 %v125, 19
      %v132 = vpop.permute.xlu0 %131
      %133 = vrot.lane.b32.xlu0 %v126, 19
      %v134 = vpop.permute.xlu0 %133
      %135 = vrot.lane.b32.xlu0 %v127, 19
      %v136 = vpop.permute.xlu0 %135
      %137 = vrot.lane.b32.xlu0 %v128, 19
      %v138 = vpop.permute.xlu0 %137
      %139 = vrot.lane.b32.xlu0 %v129, 19
      %v140 = vpop.permute.xlu0 %139
      %141 = vrot.lane.b32.xlu0 %v130, 19
      %v142 = vpop.permute.xlu0 %141
      %v143 = vlaneseq
      %v144 = vand.u32 %v143, 127
      %vm145 = vcmp.lt.s32.totalorder %v144, 19
      %v146 = vsel %vm145, %v140, %v142
      %v147 = vsel %vm145, %v138, %v140
      %v148 = vsel %vm145, %v136, %v138
      %v149 = vsel %vm145, %v134, %v136
      %v150 = vsel %vm145, %v132, %v134
      %v151 = vsel %vm145, %v142, %v132
      %152 = vst [vmem:[#allocation2] sm:$0xff] %v151
      %153 = vst [vmem:[#allocation2 + $0x8] sm:$0xff] %v150
      %154 = vst [vmem:[#allocation2 + $0x10] sm:$0xff] %v149
      %155 = vst [vmem:[#allocation2 + $0x18] sm:$0xff] %v148
      %156 = vst [vmem:[#allocation2 + $0x20] sm:$0xff] %v147
      %157 = vst [vmem:[#allocation2 + $0x28] sm:$0xff] %v146
      %158 = vrot.lane.b32.xlu0 %v125, 18
      %v159 = vpop.permute.xlu0 %158
      %160 = vrot.lane.b32.xlu0 %v126, 18
      %v161 = vpop.permute.xlu0 %160
      %162 = vrot.lane.b32.xlu0 %v127, 18
      %v163 = vpop.permute.xlu0 %162
      %164 = vrot.lane.b32.xlu0 %v128, 18
      %v165 = vpop.permute.xlu0 %164
      %166 = vrot.lane.b32.xlu0 %v129, 18
      %v167 = vpop.permute.xlu0 %166
      %168 = vrot.lane.b32.xlu0 %v130, 18
      %v169 = vpop.permute.xlu0 %168
      %vm170 = vcmp.lt.s32.totalorder %v144, 18
      %v171 = vsel %vm170, %v167, %v169
      %v172 = vsel %vm170, %v165, %v167
      %v173 = vsel %vm170, %v163, %v165
      %v174 = vsel %vm170, %v161, %v163
      %v175 = vsel %vm170, %v159, %v161
      %v176 = vsel %vm170, %v169, %v159
      %177 = vst [vmem:[#allocation2 + $0x30] sm:$0xff] %v176
      %178 = vst [vmem:[#allocation2 + $0x38] sm:$0xff] %v175
      %179 = vst [vmem:[#allocation2 + $0x40] sm:$0xff] %v174
      %180 = vst [vmem:[#allocation2 + $0x48] sm:$0xff] %v173
      %181 = vst [vmem:[#allocation2 + $0x50] sm:$0xff] %v172
      %182 = vst [vmem:[#allocation2 + $0x58] sm:$0xff] %v171
      %183 = vrot.lane.b32.xlu0 %v125, 17
      %v184 = vpop.permute.xlu0 %183
      %185 = vrot.lane.b32.xlu0 %v126, 17
      %v186 = vpop.permute.xlu0 %185
      %187 = vrot.lane.b32.xlu0 %v127, 17
      %v188 = vpop.permute.xlu0 %187
      %189 = vrot.lane.b32.xlu0 %v128, 17
      %v190 = vpop.permute.xlu0 %189
      %191 = vrot.lane.b32.xlu0 %v129, 17
      %v192 = vpop.permute.xlu0 %191
      %193 = vrot.lane.b32.xlu0 %v130, 17
      %v194 = vpop.permute.xlu0 %193
      %vm195 = vcmp.lt.s32.totalorder %v144, 17
      %v196 = vsel %vm195, %v192, %v194
      %v197 = vsel %vm195, %v190, %v192
      %v198 = vsel %vm195, %v188, %v190
      %v199 = vsel %vm195, %v186, %v188
      %v200 = vsel %vm195, %v184, %v186
      %v201 = vsel %vm195, %v194, %v184
      %202 = vst [vmem:[#allocation2 + $0x60] sm:$0xff] %v201
      %203 = vst [vmem:[#allocation2 + $0x68] sm:$0xff] %v200
      %204 = vst [vmem:[#allocation2 + $0x70] sm:$0xff] %v199
      %205 = vst [vmem:[#allocation2 + $0x78] sm:$0xff] %v198
      %206 = vst [vmem:[#allocation2 + $0x80] sm:$0xff] %v197
      %207 = vst [vmem:[#allocation2 + $0x88] sm:$0xff] %v196
      %208 = vrot.lane.b32.xlu0 %v125, 1
      %v209 = vpop.permute.xlu0 %208
      %210 = vrot.lane.b32.xlu0 %v126, 1
      %v211 = vpop.permute.xlu0 %210
      %212 = vrot.lane.b32.xlu0 %v127, 1
      %v213 = vpop.permute.xlu0 %212
      %214 = vrot.lane.b32.xlu0 %v128, 1
      %v215 = vpop.permute.xlu0 %214
      %216 = vrot.lane.b32.xlu0 %v129, 1
      %v217 = vpop.permute.xlu0 %216
      %218 = vrot.lane.b32.xlu0 %v130, 1
      %v219 = vpop.permute.xlu0 %218
      %vm220 = vcmp.lt.s32.totalorder %v144, 1
      %v221 = vsel %vm220, %v217, %v219
      %v222 = vsel %vm220, %v215, %v217
      %v223 = vsel %vm220, %v213, %v215
      %v224 = vsel %vm220, %v211, %v213
      %v225 = vsel %vm220, %v209, %v211
      %v226 = vsel %vm220, %v219, %v209
      %227 = vst [vmem:[#allocation2 + $0x90] sm:$0xff] %v226
      %228 = vst [vmem:[#allocation2 + $0x98] sm:$0xff] %v225
      %229 = vst [vmem:[#allocation2 + $0xa0] sm:$0xff] %v224
      %230 = vst [vmem:[#allocation2 + $0xa8] sm:$0xff] %v223
      %231 = vst [vmem:[#allocation2 + $0xb0] sm:$0xff] %v222
      %232 = vst [vmem:[#allocation2 + $0xb8] sm:$0xff] %v221
      %233 = vst [vmem:[#allocation2 + $0xc0] sm:$0xff] %v125
      %234 = vst [vmem:[#allocation2 + $0xc8] sm:$0xff] %v126
      %235 = vst [vmem:[#allocation2 + $0xd0] sm:$0xff] %v127
      %236 = vst [vmem:[#allocation2 + $0xd8] sm:$0xff] %v128
      %237 = vst [vmem:[#allocation2 + $0xe0] sm:$0xff] %v129
      %238 = vst [vmem:[#allocation2 + $0xe8] sm:$0xff] %v130
      %239 = vrot.lane.b32.xlu0 %v125, 127
      %v240 = vpop.permute.xlu0 %239
      %241 = vrot.lane.b32.xlu0 %v126, 127
      %v242 = vpop.permute.xlu0 %241
      %243 = vrot.lane.b32.xlu0 %v127, 127
      %v244 = vpop.permute.xlu0 %243
      %245 = vrot.lane.b32.xlu0 %v128, 127
      %v246 = vpop.permute.xlu0 %245
      %247 = vrot.lane.b32.xlu0 %v129, 127
      %v248 = vpop.permute.xlu0 %247
      %249 = vrot.lane.b32.xlu0 %v130, 127
      %v250 = vpop.permute.xlu0 %249
      %vm251 = vcmp.lt.s32.totalorder %v144, 127
      %v252 = vsel %vm251, %v248, %v250
      %v253 = vsel %vm251, %v246, %v248
      %v254 = vsel %vm251, %v244, %v246
      %v255 = vsel %vm251, %v242, %v244
      %v256 = vsel %vm251, %v240, %v242
      %v257 = vsel %vm251, %v250, %v240
      %258 = vst [vmem:[#allocation2 + $0xf0] sm:$0xff] %v256
      %259 = vst [vmem:[#allocation2 + $0xf8] sm:$0xff] %v255
      %260 = vst [vmem:[#allocation2 + $0x100] sm:$0xff] %v254
      %261 = vst [vmem:[#allocation2 + $0x108] sm:$0xff] %v253
      %262 = vst [vmem:[#allocation2 + $0x110] sm:$0xff] %v252
      %263 = vst [vmem:[#allocation2 + $0x118] sm:$0xff] %v257
      %264 = vrot.lane.b32.xlu0 %v125, 111
      %v265 = vpop.permute.xlu0 %264
      %266 = vrot.lane.b32.xlu0 %v126, 111
      %v267 = vpop.permute.xlu0 %266
      %268 = vrot.lane.b32.xlu0 %v127, 111
      %v269 = vpop.permute.xlu0 %268
      %270 = vrot.lane.b32.xlu0 %v128, 111
      %v271 = vpop.permute.xlu0 %270
      %272 = vrot.lane.b32.xlu0 %v129, 111
      %v273 = vpop.permute.xlu0 %272
      %274 = vrot.lane.b32.xlu0 %v130, 111
      %v275 = vpop.permute.xlu0 %274
      %vm276 = vcmp.lt.s32.totalorder %v144, 111
      %v277 = vsel %vm276, %v273, %v275
      %v278 = vsel %vm276, %v271, %v273
      %v279 = vsel %vm276, %v269, %v271
      %v280 = vsel %vm276, %v267, %v269
      %v281 = vsel %vm276, %v265, %v267
      %v282 = vsel %vm276, %v275, %v265
      %283 = vst [vmem:[#allocation2 + $0x120] sm:$0xff] %v281
      %284 = vst [vmem:[#allocation2 + $0x128] sm:$0xff] %v280
      %285 = vst [vmem:[#allocation2 + $0x130] sm:$0xff] %v279
      %286 = vst [vmem:[#allocation2 + $0x138] sm:$0xff] %v278
      %287 = vst [vmem:[#allocation2 + $0x140] sm:$0xff] %v277
      %288 = vst [vmem:[#allocation2 + $0x148] sm:$0xff] %v282
      %289 = vrot.lane.b32.xlu0 %v125, 110
      %v290 = vpop.permute.xlu0 %289
      %291 = vrot.lane.b32.xlu0 %v126, 110
      %v292 = vpop.permute.xlu0 %291
      %293 = vrot.lane.b32.xlu0 %v127, 110
      %v294 = vpop.permute.xlu0 %293
      %295 = vrot.lane.b32.xlu0 %v128, 110
      %v296 = vpop.permute.xlu0 %295
      %297 = vrot.lane.b32.xlu0 %v129, 110
      %v298 = vpop.permute.xlu0 %297
      %299 = vrot.lane.b32.xlu0 %v130, 110
      %v300 = vpop.permute.xlu0 %299
      %vm301 = vcmp.lt.s32.totalorder %v144, 110
      %v302 = vsel %vm301, %v298, %v300
      %v303 = vsel %vm301, %v296, %v298
      %v304 = vsel %vm301, %v294, %v296
      %v305 = vsel %vm301, %v292, %v294
      %v306 = vsel %vm301, %v290, %v292
      %v307 = vsel %vm301, %v300, %v290
      %308 = vst [vmem:[#allocation2 + $0x150] sm:$0xff] %v306
      %309 = vst [vmem:[#allocation2 + $0x158] sm:$0xff] %v305
      %310 = vst [vmem:[#allocation2 + $0x160] sm:$0xff] %v304
      %311 = vst [vmem:[#allocation2 + $0x168] sm:$0xff] %v303
      %312 = vst [vmem:[#allocation2 + $0x170] sm:$0xff] %v302
      %313 = vst [vmem:[#allocation2 + $0x178] sm:$0xff] %v307
      %314 = vrot.lane.b32.xlu0 %v125, 109
      %v315 = vpop.permute.xlu0 %314
      %316 = vrot.lane.b32.xlu0 %v126, 109
      %v317 = vpop.permute.xlu0 %316
      %318 = vrot.lane.b32.xlu0 %v127, 109
      %v319 = vpop.permute.xlu0 %318
      %320 = vrot.lane.b32.xlu0 %v128, 109
      %v321 = vpop.permute.xlu0 %320
      %322 = vrot.lane.b32.xlu0 %v129, 109
      %v323 = vpop.permute.xlu0 %322
      %324 = vrot.lane.b32.xlu0 %v130, 109
      %v325 = vpop.permute.xlu0 %324
      %vm326 = vcmp.lt.s32.totalorder %v144, 109
      %v327 = vsel %vm326, %v323, %v325
      %v328 = vsel %vm326, %v321, %v323
      %v329 = vsel %vm326, %v319, %v321
      %v330 = vsel %vm326, %v317, %v319
      %v331 = vsel %vm326, %v315, %v317
      %v332 = vsel %vm326, %v325, %v315
      %333 = vst [vmem:[#allocation2 + $0x180] sm:$0xff] %v331
      %334 = vst [vmem:[#allocation2 + $0x188] sm:$0xff] %v330
      %335 = vst [vmem:[#allocation2 + $0x190] sm:$0xff] %v329
      %336 = vst [vmem:[#allocation2 + $0x198] sm:$0xff] %v328
      %337 = vst [vmem:[#allocation2 + $0x1a0] sm:$0xff] %v327
      %338 = vst [vmem:[#allocation2 + $0x1a8] sm:$0xff] %v332
      %v339 = vld [vmem:[#allocation2] sm:$0xff]
      %v340 = vld [vmem:[#allocation2 + $0x8] sm:$0xff]
      %v341 = vld [vmem:[#allocation2 + $0x10] sm:$0xff]
      %v342 = vld [vmem:[#allocation2 + $0x18] sm:$0xff]
      %v343 = vld [vmem:[#allocation2 + $0x20] sm:$0xff]
      %v344 = vld [vmem:[#allocation2 + $0x28] sm:$0xff]
      %v345 = vld [vmem:[#allocation2 + $0x30] sm:$0xff]
      %v346 = vld [vmem:[#allocation2 + $0x38] sm:$0xff]
      %v347 = vld [vmem:[#allocation2 + $0x40] sm:$0xff]
      %v348 = vld [vmem:[#allocation2 + $0x48] sm:$0xff]
      %v349 = vld [vmem:[#allocation2 + $0x50] sm:$0xff]
      %v350 = vld [vmem:[#allocation2 + $0x58] sm:$0xff]
      %v351 = vld [vmem:[#allocation2 + $0x60] sm:$0xff]
      %v352 = vld [vmem:[#allocation2 + $0x68] sm:$0xff]
      %v353 = vld [vmem:[#allocation2 + $0x70] sm:$0xff]
      %v354 = vld [vmem:[#allocation2 + $0x78] sm:$0xff]
      %v355 = vld [vmem:[#allocation2 + $0x80] sm:$0xff]
      %v356 = vld [vmem:[#allocation2 + $0x88] sm:$0xff]
      %v357 = vld [vmem:[#allocation2 + $0x90] sm:$0xff]
      %v358 = vld [vmem:[#allocation2 + $0x98] sm:$0xff]
      %v359 = vld [vmem:[#allocation2 + $0xa0] sm:$0xff]
      %v360 = vld [vmem:[#allocation2 + $0xa8] sm:$0xff]
      %v361 = vld [vmem:[#allocation2 + $0xb0] sm:$0xff]
      %v362 = vld [vmem:[#allocation2 + $0xb8] sm:$0xff]
      %v363 = vld [vmem:[#allocation2 + $0xc0] sm:$0xff]
      %v364 = vld [vmem:[#allocation2 + $0xc8] sm:$0xff]
      %v365 = vld [vmem:[#allocation2 + $0xd0] sm:$0xff]
      %v366 = vld [vmem:[#allocation2 + $0xd8] sm:$0xff]
      %v367 = vld [vmem:[#allocation2 + $0xe0] sm:$0xff]
      %v368 = vld [vmem:[#allocation2 + $0xe8] sm:$0xff]
      %v369 = vld [vmem:[#allocation2 + $0xf0] sm:$0xff]
      %v370 = vld [vmem:[#allocation2 + $0xf8] sm:$0xff]
      %v371 = vld [vmem:[#allocation2 + $0x100] sm:$0xff]
      %v372 = vld [vmem:[#allocation2 + $0x108] sm:$0xff]
      %v373 = vld [vmem:[#allocation2 + $0x110] sm:$0xff]
      %v374 = vld [vmem:[#allocation2 + $0x118] sm:$0xff]
      %v375 = vld [vmem:[#allocation2 + $0x120] sm:$0xff]
      %v376 = vld [vmem:[#allocation2 + $0x128] sm:$0xff]
      %v377 = vld [vmem:[#allocation2 + $0x130] sm:$0xff]
      %v378 = vld [vmem:[#allocation2 + $0x138] sm:$0xff]
      %v379 = vld [vmem:[#allocation2 + $0x140] sm:$0xff]
      %v380 = vld [vmem:[#allocation2 + $0x148] sm:$0xff]
      %v381 = vld [vmem:[#allocation2 + $0x150] sm:$0xff]
      %v382 = vld [vmem:[#allocation2 + $0x158] sm:$0xff]
      %v383 = vld [vmem:[#allocation2 + $0x160] sm:$0xff]
      %v384 = vld [vmem:[#allocation2 + $0x168] sm:$0xff]
      %v385 = vld [vmem:[#allocation2 + $0x170] sm:$0xff]
      %v386 = vld [vmem:[#allocation2 + $0x178] sm:$0xff]
      %v387 = vld [vmem:[#allocation2 + $0x180] sm:$0xff]
      %v388 = vld [vmem:[#allocation2 + $0x188] sm:$0xff]
      %v389 = vld [vmem:[#allocation2 + $0x190] sm:$0xff]
      %v390 = vld [vmem:[#allocation2 + $0x198] sm:$0xff]
      %v391 = vld [vmem:[#allocation2 + $0x1a0] sm:$0xff]
      %v392 = vld [vmem:[#allocation2 + $0x1a8] sm:$0xff]
      %vm393 = vcmask 588800
      %v395 = vsel %vm393, %v67, 0
      %v398 = vsel %vm393, %v68, 0
      %400 = vmatprep.subr.mxu0 0.0
      %401 = vmatpush1.msra.mxu0 0.0
      %402 = vmatprep.subr.mxu0 0.0
      %403 = vmatpush1.msra.mxu0 0.0
      %404 = vmatprep.subr.mxu0 0.0
      %405 = vmatpush1.msra.mxu0 0.0
      %406 = vmatprep.subr.mxu0 0.0
      %407 = vmatpush1.msra.mxu0 0.0
      %408 = vmatprep.subr.mxu0 0.0
      %409 = vmatpush1.msra.mxu0 0.0
      %410 = vmatprep.subr.mxu0 0.0
      %411 = vmatpush1.msra.mxu0 0.0
      %412 = vmatprep.subr.mxu0 0.0
      %413 = vmatpush1.msra.mxu0 0.0
      %414 = vmatprep.subr.mxu0 %v388
      %415 = vmatpush1.msra.mxu0 %v387
      %416 = vmatprep.subr.mxu0 %v382
      %417 = vmatpush1.msra.mxu0 %v381
      %418 = vmatprep.subr.mxu0 %v376
      %419 = vmatpush1.msra.mxu0 %v375
      %420 = vmatprep.subr.mxu0 %v370
      %421 = vmatpush1.msra.mxu0 %v369
      %422 = vmatprep.subr.mxu0 %v364
      %423 = vmatpush1.msra.mxu0 %v363
      %424 = vmatprep.subr.mxu0 %v358
      %425 = vmatpush1.msra.mxu0 %v357
      %426 = vmatprep.subr.mxu0 %v352
      %427 = vmatpush1.msra.mxu0 %v351
      %428 = vmatprep.subr.mxu0 %v346
      %429 = vmatpush1.msra.mxu0 %v345
      %430 = vmatprep.subr.mxu0 %v340
      %431 = vmatpush1.msra.mxu0 %v339
      %432 = vmatprep.subr.mxu0 0.0
      %433 = vmatpush2.msra.mxu0 0.0
      %434 = vmatprep.subr.mxu0 0.0
      %435 = vmatpush2.msra.mxu0 0.0
      %436 = vmatprep.subr.mxu0 0.0
      %437 = vmatpush2.msra.mxu0 0.0
      %438 = vmatprep.subr.mxu0 0.0
      %439 = vmatpush2.msra.mxu0 0.0
      %440 = vmatprep.subr.mxu0 0.0
      %441 = vmatpush2.msra.mxu0 0.0
      %442 = vmatprep.subr.mxu0 0.0
      %443 = vmatpush2.msra.mxu0 0.0
      %444 = vmatprep.subr.mxu0 0.0
      %445 = vmatpush2.msra.mxu0 0.0
      %446 = vmatprep.subr.mxu0 0.0
      %447 = vmatpush2.msra.mxu0 0.0
      %448 = vmatprep.subr.mxu0 0.0
      %449 = vmatpush2.msra.mxu0 0.0
      %450 = vmatprep.subr.mxu0 0.0
      %451 = vmatpush2.msra.mxu0 0.0
      %452 = vmatprep.subr.mxu0 0.0
      %453 = vmatpush2.msra.mxu0 0.0
      %454 = vmatprep.subr.mxu0 0.0
      %455 = vmatpush2.msra.mxu0 0.0
      %456 = vmatprep.subr.mxu0 0.0
      %457 = vmatpush2.msra.mxu0 0.0
      %458 = vmatprep.subr.mxu0 0.0
      %459 = vmatpush2.msra.mxu0 0.0
      %460 = vmatprep.subr.mxu0 0.0
      %461 = vmatpush2.msra.mxu0 0.0
      %462 = vmatprep.subr.mxu0 0.0
      %463 = vmatpush2.msra.mxu0 0.0
      %464 = vmatprep.mubr.f32.mxu0 0.0
      %465 = vmatmul.mubr.f32.gmra.mxu0 %v395
      %v466 = vpop.f32.mrf.mxu0
      %v467 = vadd.f32 %v75, %v466
      %v468 = vpop.f32.mrf.mxu0
      %v469 = vadd.f32 %v75, %v468
      %470 = vmatprep.mubr.f32.mxu0 0.0
      %471 = vmatmul.mubr.f32.gmra.mxu0 %v398
      %v472 = vpop.f32.mrf.mxu0
      %v473 = vadd.f32 %v80, %v472
      %v474 = vpop.f32.mrf.mxu0
      %v475 = vadd.f32 %v80, %v474
      %476 = vdwg.mxu0
      %477 = vmatprep.subr.mxu0 0.0
      %478 = vmatpush1.msra.mxu0 0.0
      %479 = vmatprep.subr.mxu0 0.0
      %480 = vmatpush1.msra.mxu0 0.0
      %481 = vmatprep.subr.mxu0 0.0
      %482 = vmatpush1.msra.mxu0 0.0
      %483 = vmatprep.subr.mxu0 0.0
      %484 = vmatpush1.msra.mxu0 0.0
      %485 = vmatprep.subr.mxu0 0.0
      %486 = vmatpush1.msra.mxu0 0.0
      %487 = vmatprep.subr.mxu0 0.0
      %488 = vmatpush1.msra.mxu0 0.0
      %489 = vmatprep.subr.mxu0 0.0
      %490 = vmatpush1.msra.mxu0 0.0
      %491 = vmatprep.subr.mxu0 %v390
      %492 = vmatpush1.msra.mxu0 %v389
      %493 = vmatprep.subr.mxu0 %v384
      %494 = vmatpush1.msra.mxu0 %v383
      %495 = vmatprep.subr.mxu0 %v378
      %496 = vmatpush1.msra.mxu0 %v377
      %497 = vmatprep.subr.mxu0 %v372
      %498 = vmatpush1.msra.mxu0 %v371
      %499 = vmatprep.subr.mxu0 %v366
      %500 = vmatpush1.msra.mxu0 %v365
      %501 = vmatprep.subr.mxu0 %v360
      %502 = vmatpush1.msra.mxu0 %v359
      %503 = vmatprep.subr.mxu0 %v354
      %504 = vmatpush1.msra.mxu0 %v353
      %505 = vmatprep.subr.mxu0 %v348
      %506 = vmatpush1.msra.mxu0 %v347
      %507 = vmatprep.subr.mxu0 %v342
      %508 = vmatpush1.msra.mxu0 %v341
      %509 = vmatprep.subr.mxu0 0.0
      %510 = vmatpush2.msra.mxu0 0.0
      %511 = vmatprep.subr.mxu0 0.0
      %512 = vmatpush2.msra.mxu0 0.0
      %513 = vmatprep.subr.mxu0 0.0
      %514 = vmatpush2.msra.mxu0 0.0
      %515 = vmatprep.subr.mxu0 0.0
      %516 = vmatpush2.msra.mxu0 0.0
      %517 = vmatprep.subr.mxu0 0.0
      %518 = vmatpush2.msra.mxu0 0.0
      %519 = vmatprep.subr.mxu0 0.0
      %520 = vmatpush2.msra.mxu0 0.0
      %521 = vmatprep.subr.mxu0 0.0
      %522 = vmatpush2.msra.mxu0 0.0
      %523 = vmatprep.subr.mxu0 0.0
      %524 = vmatpush2.msra.mxu0 0.0
      %525 = vmatprep.subr.mxu0 0.0
      %526 = vmatpush2.msra.mxu0 0.0
      %527 = vmatprep.subr.mxu0 0.0
      %528 = vmatpush2.msra.mxu0 0.0
      %529 = vmatprep.subr.mxu0 0.0
      %530 = vmatpush2.msra.mxu0 0.0
      %531 = vmatprep.subr.mxu0 0.0
      %532 = vmatpush2.msra.mxu0 0.0
      %533 = vmatprep.subr.mxu0 0.0
      %534 = vmatpush2.msra.mxu0 0.0
      %535 = vmatprep.subr.mxu0 0.0
      %536 = vmatpush2.msra.mxu0 0.0
      %537 = vmatprep.subr.mxu0 0.0
      %538 = vmatpush2.msra.mxu0 0.0
      %539 = vmatprep.subr.mxu0 0.0
      %540 = vmatpush2.msra.mxu0 0.0
      %541 = vmatprep.mubr.f32.mxu0 0.0
      %542 = vmatmul.mubr.f32.gmra.mxu0 %v395
      %v543 = vpop.f32.mrf.mxu0
      %v544 = vadd.f32 %v75, %v543
      %v545 = vpop.f32.mrf.mxu0
      %v546 = vadd.f32 %v75, %v545
      %547 = vmatprep.mubr.f32.mxu0 0.0
      %548 = vmatmul.mubr.f32.gmra.mxu0 %v398
      %v549 = vpop.f32.mrf.mxu0
      %v550 = vadd.f32 %v80, %v549
      %v551 = vpop.f32.mrf.mxu0
      %v552 = vadd.f32 %v80, %v551
      %553 = vdwg.mxu0
      %554 = vmatprep.subr.mxu0 0.0
      %555 = vmatpush1.msra.mxu0 0.0
      %556 = vmatprep.subr.mxu0 0.0
      %557 = vmatpush1.msra.mxu0 0.0
      %558 = vmatprep.subr.mxu0 0.0
      %559 = vmatpush1.msra.mxu0 0.0
      %560 = vmatprep.subr.mxu0 0.0
      %561 = vmatpush1.msra.mxu0 0.0
      %562 = vmatprep.subr.mxu0 0.0
      %563 = vmatpush1.msra.mxu0 0.0
      %564 = vmatprep.subr.mxu0 0.0
      %565 = vmatpush1.msra.mxu0 0.0
      %566 = vmatprep.subr.mxu0 0.0
      %567 = vmatpush1.msra.mxu0 0.0
      %568 = vmatprep.subr.mxu0 %v392
      %569 = vmatpush1.msra.mxu0 %v391
      %570 = vmatprep.subr.mxu0 %v386
      %571 = vmatpush1.msra.mxu0 %v385
      %572 = vmatprep.subr.mxu0 %v380
      %573 = vmatpush1.msra.mxu0 %v379
      %574 = vmatprep.subr.mxu0 %v374
      %575 = vmatpush1.msra.mxu0 %v373
      %576 = vmatprep.subr.mxu0 %v368
      %577 = vmatpush1.msra.mxu0 %v367
      %578 = vmatprep.subr.mxu0 %v362
      %579 = vmatpush1.msra.mxu0 %v361
      %580 = vmatprep.subr.mxu0 %v356
      %581 = vmatpush1.msra.mxu0 %v355
      %582 = vmatprep.subr.mxu0 %v350
      %583 = vmatpush1.msra.mxu0 %v349
      %584 = vmatprep.subr.mxu0 %v344
      %585 = vmatpush1.msra.mxu0 %v343
      %586 = vmatprep.subr.mxu0 0.0
      %587 = vmatpush2.msra.mxu0 0.0
      %588 = vmatprep.subr.mxu0 0.0
      %589 = vmatpush2.msra.mxu0 0.0
      %590 = vmatprep.subr.mxu0 0.0
      %591 = vmatpush2.msra.mxu0 0.0
      %592 = vmatprep.subr.mxu0 0.0
      %593 = vmatpush2.msra.mxu0 0.0
      %594 = vmatprep.subr.mxu0 0.0
      %595 = vmatpush2.msra.mxu0 0.0
      %596 = vmatprep.subr.mxu0 0.0
      %597 = vmatpush2.msra.mxu0 0.0
      %598 = vmatprep.subr.mxu0 0.0
      %599 = vmatpush2.msra.mxu0 0.0
      %600 = vmatprep.subr.mxu0 0.0
      %601 = vmatpush2.msra.mxu0 0.0
      %602 = vmatprep.subr.mxu0 0.0
      %603 = vmatpush2.msra.mxu0 0.0
      %604 = vmatprep.subr.mxu0 0.0
      %605 = vmatpush2.msra.mxu0 0.0
      %606 = vmatprep.subr.mxu0 0.0
      %607 = vmatpush2.msra.mxu0 0.0
      %608 = vmatprep.subr.mxu0 0.0
      %609 = vmatpush2.msra.mxu0 0.0
      %610 = vmatprep.subr.mxu0 0.0
      %611 = vmatpush2.msra.mxu0 0.0
      %612 = vmatprep.subr.mxu0 0.0
      %613 = vmatpush2.msra.mxu0 0.0
      %614 = vmatprep.subr.mxu0 0.0
      %615 = vmatpush2.msra.mxu0 0.0
      %616 = vmatprep.subr.mxu0 0.0
      %617 = vmatpush2.msra.mxu0 0.0
      %618 = vmatprep.mubr.f32.mxu0 0.0
      %619 = vmatmul.mubr.f32.gmra.mxu0 %v395
      %v620 = vpop.f32.mrf.mxu0
      %v621 = vadd.f32 %v75, %v620
      %v622 = vpop.f32.mrf.mxu0
      %v623 = vadd.f32 %v75, %v622
      %624 = vmatprep.mubr.f32.mxu0 0.0
      %625 = vmatmul.mubr.f32.gmra.mxu0 %v398
      %v626 = vpop.f32.mrf.mxu0
      %v627 = vadd.f32 %v80, %v626
      %v628 = vpop.f32.mrf.mxu0
      %v629 = vadd.f32 %v80, %v628
      %630 = vdwg.mxu0
      %vm631 = vcmp.ge.f32.partialorder %v467, 0.0
      %vm632 = vcmp.ge.f32.partialorder %v469, 0.0
      %vm633 = vcmp.ge.f32.partialorder %v544, 0.0
      %vm634 = vcmp.ge.f32.partialorder %v546, 0.0
      %vm635 = vcmp.ge.f32.partialorder %v621, 0.0
      %vm636 = vcmp.ge.f32.partialorder %v623, 0.0
      %vm637 = vcmp.ge.f32.partialorder %v473, 0.0
      %vm638 = vcmp.ge.f32.partialorder %v475, 0.0
      %vm639 = vcmp.ge.f32.partialorder %v550, 0.0
      %vm640 = vcmp.ge.f32.partialorder %v552, 0.0
      %vm641 = vcmp.ge.f32.partialorder %v627, 0.0
      %vm642 = vcmp.ge.f32.partialorder %v629, 0.0
      %v643 = vmul.f32 %v467, 0.2
      %v644 = vmul.f32 %v469, 0.2
      %v645 = vmul.f32 %v544, 0.2
      %v646 = vmul.f32 %v546, 0.2
      %v647 = vmul.f32 %v621, 0.2
      %v648 = vmul.f32 %v623, 0.2
      %v649 = vmul.f32 %v473, 0.2
      %v650 = vmul.f32 %v475, 0.2
      %v651 = vmul.f32 %v550, 0.2
      %v652 = vmul.f32 %v552, 0.2
      %v653 = vmul.f32 %v627, 0.2
      %v654 = vmul.f32 %v629, 0.2
      %v655 = vsel %vm631, %v467, %v643
      %v656 = vsel %vm632, %v469, %v644
      %v657 = vsel %vm633, %v544, %v645
      %v658 = vsel %vm634, %v546, %v646
      %v659 = vsel %vm635, %v621, %v647
      %v660 = vsel %vm636, %v623, %v648
      %v661 = vsel %vm637, %v473, %v649
      %v662 = vsel %vm638, %v475, %v650
      %v663 = vsel %vm639, %v550, %v651
      %v664 = vsel %vm640, %v552, %v652
      %v665 = vsel %vm641, %v627, %v653
      %v666 = vsel %vm642, %v629, %v654
      %vm667 = vcmask 130048
      %v669 = vsel %vm667, %v69, 0
      %671 = vmatprep.subr.mxu0 0.0
      %672 = vmatpush1.msra.mxu0 0.0
      %673 = vmatprep.subr.mxu0 0.0
      %674 = vmatpush1.msra.mxu0 0.0
      %675 = vmatprep.subr.mxu0 0.0
      %676 = vmatpush1.msra.mxu0 0.0
      %677 = vmatprep.subr.mxu0 0.0
      %678 = vmatpush1.msra.mxu0 0.0
      %679 = vmatprep.subr.mxu0 0.0
      %680 = vmatpush1.msra.mxu0 0.0
      %681 = vmatprep.subr.mxu0 0.0
      %682 = vmatpush1.msra.mxu0 0.0
      %683 = vmatprep.subr.mxu0 0.0
      %684 = vmatpush1.msra.mxu0 0.0
      %685 = vmatprep.subr.mxu0 0.0
      %686 = vmatpush1.msra.mxu0 0.0
      %687 = vmatprep.subr.mxu0 0.0
      %688 = vmatpush1.msra.mxu0 0.0
      %689 = vmatprep.subr.mxu0 0.0
      %690 = vmatpush1.msra.mxu0 0.0
      %691 = vmatprep.subr.mxu0 0.0
      %692 = vmatpush1.msra.mxu0 0.0
      %693 = vmatprep.subr.mxu0 0.0
      %694 = vmatpush1.msra.mxu0 0.0
      %695 = vmatprep.subr.mxu0 0.0
      %696 = vmatpush1.msra.mxu0 0.0
      %697 = vmatprep.subr.mxu0 0.0
      %698 = vmatpush1.msra.mxu0 0.0
      %699 = vmatprep.subr.mxu0 %v662
      %700 = vmatpush1.msra.mxu0 %v661
      %701 = vmatprep.subr.mxu0 %v656
      %702 = vmatpush1.msra.mxu0 %v655
      %703 = vmatprep.subr.mxu0 0.0
      %704 = vmatpush2.msra.mxu0 0.0
      %705 = vmatprep.subr.mxu0 0.0
      %706 = vmatpush2.msra.mxu0 0.0
      %707 = vmatprep.subr.mxu0 0.0
      %708 = vmatpush2.msra.mxu0 0.0
      %709 = vmatprep.subr.mxu0 0.0
      %710 = vmatpush2.msra.mxu0 0.0
      %711 = vmatprep.subr.mxu0 0.0
      %712 = vmatpush2.msra.mxu0 0.0
      %713 = vmatprep.subr.mxu0 0.0
      %714 = vmatpush2.msra.mxu0 0.0
      %715 = vmatprep.subr.mxu0 0.0
      %716 = vmatpush2.msra.mxu0 0.0
      %717 = vmatprep.subr.mxu0 0.0
      %718 = vmatpush2.msra.mxu0 0.0
      %719 = vmatprep.subr.mxu0 0.0
      %720 = vmatpush2.msra.mxu0 0.0
      %721 = vmatprep.subr.mxu0 0.0
      %722 = vmatpush2.msra.mxu0 0.0
      %723 = vmatprep.subr.mxu0 0.0
      %724 = vmatpush2.msra.mxu0 0.0
      %725 = vmatprep.subr.mxu0 0.0
      %726 = vmatpush2.msra.mxu0 0.0
      %727 = vmatprep.subr.mxu0 0.0
      %728 = vmatpush2.msra.mxu0 0.0
      %729 = vmatprep.subr.mxu0 0.0
      %730 = vmatpush2.msra.mxu0 0.0
      %731 = vmatprep.subr.mxu0 0.0
      %732 = vmatpush2.msra.mxu0 0.0
      %733 = vmatprep.subr.mxu0 0.0
      %734 = vmatpush2.msra.mxu0 0.0
      %735 = vmatprep.mubr.f32.mxu0 0.0
      %736 = vmatmul.mubr.f32.gmra.mxu0 %v669
      %v737 = vpop.f32.mrf.mxu0
      %v738 = vadd.f32 0.0, %v737
      %v739 = vpop.f32.mrf.mxu0
      %v740 = vadd.f32 0.0, %v739
      %741 = vdwg.mxu0
      %742 = vmatprep.subr.mxu0 0.0
      %743 = vmatpush1.msra.mxu0 0.0
      %744 = vmatprep.subr.mxu0 0.0
      %745 = vmatpush1.msra.mxu0 0.0
      %746 = vmatprep.subr.mxu0 0.0
      %747 = vmatpush1.msra.mxu0 0.0
      %748 = vmatprep.subr.mxu0 0.0
      %749 = vmatpush1.msra.mxu0 0.0
      %750 = vmatprep.subr.mxu0 0.0
      %751 = vmatpush1.msra.mxu0 0.0
      %752 = vmatprep.subr.mxu0 0.0
      %753 = vmatpush1.msra.mxu0 0.0
      %754 = vmatprep.subr.mxu0 0.0
      %755 = vmatpush1.msra.mxu0 0.0
      %756 = vmatprep.subr.mxu0 0.0
      %757 = vmatpush1.msra.mxu0 0.0
      %758 = vmatprep.subr.mxu0 0.0
      %759 = vmatpush1.msra.mxu0 0.0
      %760 = vmatprep.subr.mxu0 0.0
      %761 = vmatpush1.msra.mxu0 0.0
      %762 = vmatprep.subr.mxu0 0.0
      %763 = vmatpush1.msra.mxu0 0.0
      %764 = vmatprep.subr.mxu0 0.0
      %765 = vmatpush1.msra.mxu0 0.0
      %766 = vmatprep.subr.mxu0 0.0
      %767 = vmatpush1.msra.mxu0 0.0
      %768 = vmatprep.subr.mxu0 0.0
      %769 = vmatpush1.msra.mxu0 0.0
      %770 = vmatprep.subr.mxu0 %v664
      %771 = vmatpush1.msra.mxu0 %v663
      %772 = vmatprep.subr.mxu0 %v658
      %773 = vmatpush1.msra.mxu0 %v657
      %774 = vmatprep.subr.mxu0 0.0
      %775 = vmatpush2.msra.mxu0 0.0
      %776 = vmatprep.subr.mxu0 0.0
      %777 = vmatpush2.msra.mxu0 0.0
      %778 = vmatprep.subr.mxu0 0.0
      %779 = vmatpush2.msra.mxu0 0.0
      %780 = vmatprep.subr.mxu0 0.0
      %781 = vmatpush2.msra.mxu0 0.0
      %782 = vmatprep.subr.mxu0 0.0
      %783 = vmatpush2.msra.mxu0 0.0
      %784 = vmatprep.subr.mxu0 0.0
      %785 = vmatpush2.msra.mxu0 0.0
      %786 = vmatprep.subr.mxu0 0.0
      %787 = vmatpush2.msra.mxu0 0.0
      %788 = vmatprep.subr.mxu0 0.0
      %789 = vmatpush2.msra.mxu0 0.0
      %790 = vmatprep.subr.mxu0 0.0
      %791 = vmatpush2.msra.mxu0 0.0
      %792 = vmatprep.subr.mxu0 0.0
      %793 = vmatpush2.msra.mxu0 0.0
      %794 = vmatprep.subr.mxu0 0.0
      %795 = vmatpush2.msra.mxu0 0.0
      %796 = vmatprep.subr.mxu0 0.0
      %797 = vmatpush2.msra.mxu0 0.0
      %798 = vmatprep.subr.mxu0 0.0
      %799 = vmatpush2.msra.mxu0 0.0
      %800 = vmatprep.subr.mxu0 0.0
      %801 = vmatpush2.msra.mxu0 0.0
      %802 = vmatprep.subr.mxu0 0.0
      %803 = vmatpush2.msra.mxu0 0.0
      %804 = vmatprep.subr.mxu0 0.0
      %805 = vmatpush2.msra.mxu0 0.0
      %806 = vmatprep.mubr.f32.mxu0 0.0
      %807 = vmatmul.mubr.f32.gmra.mxu0 %v669
      %v808 = vpop.f32.mrf.mxu0
      %v809 = vadd.f32 0.0, %v808
      %v810 = vpop.f32.mrf.mxu0
      %v811 = vadd.f32 0.0, %v810
      %812 = vdwg.mxu0
      %813 = vmatprep.subr.mxu0 0.0
      %814 = vmatpush1.msra.mxu0 0.0
      %815 = vmatprep.subr.mxu0 0.0
      %816 = vmatpush1.msra.mxu0 0.0
      %817 = vmatprep.subr.mxu0 0.0
      %818 = vmatpush1.msra.mxu0 0.0
      %819 = vmatprep.subr.mxu0 0.0
      %820 = vmatpush1.msra.mxu0 0.0
      %821 = vmatprep.subr.mxu0 0.0
      %822 = vmatpush1.msra.mxu0 0.0
      %823 = vmatprep.subr.mxu0 0.0
      %824 = vmatpush1.msra.mxu0 0.0
      %825 = vmatprep.subr.mxu0 0.0
      %826 = vmatpush1.msra.mxu0 0.0
      %827 = vmatprep.subr.mxu0 0.0
      %828 = vmatpush1.msra.mxu0 0.0
      %829 = vmatprep.subr.mxu0 0.0
      %830 = vmatpush1.msra.mxu0 0.0
      %831 = vmatprep.subr.mxu0 0.0
      %832 = vmatpush1.msra.mxu0 0.0
      %833 = vmatprep.subr.mxu0 0.0
      %834 = vmatpush1.msra.mxu0 0.0
      %835 = vmatprep.subr.mxu0 0.0
      %836 = vmatpush1.msra.mxu0 0.0
      %837 = vmatprep.subr.mxu0 0.0
      %838 = vmatpush1.msra.mxu0 0.0
      %839 = vmatprep.subr.mxu0 0.0
      %840 = vmatpush1.msra.mxu0 0.0
      %841 = vmatprep.subr.mxu0 %v666
      %842 = vmatpush1.msra.mxu0 %v665
      %843 = vmatprep.subr.mxu0 %v660
      %844 = vmatpush1.msra.mxu0 %v659
      %845 = vmatprep.subr.mxu0 0.0
      %846 = vmatpush2.msra.mxu0 0.0
      %847 = vmatprep.subr.mxu0 0.0
      %848 = vmatpush2.msra.mxu0 0.0
      %849 = vmatprep.subr.mxu0 0.0
      %850 = vmatpush2.msra.mxu0 0.0
      %851 = vmatprep.subr.mxu0 0.0
      %852 = vmatpush2.msra.mxu0 0.0
      %853 = vmatprep.subr.mxu0 0.0
      %854 = vmatpush2.msra.mxu0 0.0
      %855 = vmatprep.subr.mxu0 0.0
      %856 = vmatpush2.msra.mxu0 0.0
      %857 = vmatprep.subr.mxu0 0.0
      %858 = vmatpush2.msra.mxu0 0.0
      %859 = vmatprep.subr.mxu0 0.0
      %860 = vmatpush2.msra.mxu0 0.0
      %861 = vmatprep.subr.mxu0 0.0
      %862 = vmatpush2.msra.mxu0 0.0
      %863 = vmatprep.subr.mxu0 0.0
      %864 = vmatpush2.msra.mxu0 0.0
      %865 = vmatprep.subr.mxu0 0.0
      %866 = vmatpush2.msra.mxu0 0.0
      %867 = vmatprep.subr.mxu0 0.0
      %868 = vmatpush2.msra.mxu0 0.0
      %869 = vmatprep.subr.mxu0 0.0
      %870 = vmatpush2.msra.mxu0 0.0
      %871 = vmatprep.subr.mxu0 0.0
      %872 = vmatpush2.msra.mxu0 0.0
      %873 = vmatprep.subr.mxu0 0.0
      %874 = vmatpush2.msra.mxu0 0.0
      %875 = vmatprep.subr.mxu0 0.0
      %876 = vmatpush2.msra.mxu0 0.0
      %877 = vmatprep.mubr.f32.mxu0 0.0
      %878 = vmatmul.mubr.f32.gmra.mxu0 %v669
      %v879 = vpop.f32.mrf.mxu0
      %v880 = vadd.f32 0.0, %v879
      %v881 = vpop.f32.mrf.mxu0
      %v882 = vadd.f32 0.0, %v881
      %883 = vdwg.mxu0
      %v884 = vadd.f32 %v61, %v738
      %v885 = vadd.f32 %v62, %v740
      %v886 = vadd.f32 %v63, %v809
      %v887 = vadd.f32 %v64, %v811
      %v888 = vadd.f32 %v65, %v880
      %v889 = vadd.f32 %v66, %v882
      %v890 = vrot.slane %v884, 4
      %v891 = vmax.f32 %v884, %v890
      %v892 = vrot.slane %v891, 2
      %v893 = vmax.f32 %v891, %v892
      %v894 = vrot.slane %v893, 1
      %v895 = vmax.f32 %v893, %v894
      %v896 = vrot.slane %v885, 4
      %v897 = vmax.f32 %v885, %v896
      %v898 = vrot.slane %v897, 2
      %v899 = vmax.f32 %v897, %v898
      %v900 = vrot.slane %v899, 1
      %v901 = vmax.f32 %v899, %v900
      %v902 = vrot.slane %v886, 4
      %v903 = vmax.f32 %v886, %v902
      %v904 = vrot.slane %v903, 2
      %v905 = vmax.f32 %v903, %v904
      %v906 = vrot.slane %v905, 1
      %v907 = vmax.f32 %v905, %v906
      %v908 = vrot.slane %v887, 4
      %v909 = vmax.f32 %v887, %v908
      %v910 = vrot.slane %v909, 2
      %v911 = vmax.f32 %v909, %v910
      %v912 = vrot.slane %v911, 1
      %v913 = vmax.f32 %v911, %v912
      %v914 = vrot.slane %v888, 4
      %v915 = vmax.f32 %v888, %v914
      %v916 = vrot.slane %v915, 2
      %v917 = vmax.f32 %v915, %v916
      %v918 = vrot.slane %v917, 1
      %v919 = vmax.f32 %v917, %v918
      %v920 = vrot.slane %v889, 4
      %v921 = vmax.f32 %v889, %v920
      %v922 = vrot.slane %v921, 2
      %v923 = vmax.f32 %v921, %v922
      %v924 = vrot.slane %v923, 1
      %v925 = vmax.f32 %v923, %v924
      %v926 = vsub.f32 %v884, %v895
      %v927 = vsub.f32 %v885, %v901
      %v928 = vsub.f32 %v886, %v907
      %v929 = vsub.f32 %v887, %v913
      %v930 = vsub.f32 %v888, %v919
      %v931 = vsub.f32 %v889, %v925
      %v932 = vmul.f32 %v926, 1.442695
      %v933 = vpow.pop %v932
      %v934 = vmul.f32 %v927, 1.442695
      %v935 = vpow.pop %v934
      %v936 = vmul.f32 %v928, 1.442695
      %v937 = vpow.pop %v936
      %v938 = vmul.f32 %v929, 1.442695
      %v939 = vpow.pop %v938
      %v940 = vmul.f32 %v930, 1.442695
      %v941 = vpow.pop %v940
      %v942 = vmul.f32 %v931, 1.442695
      %v943 = vpow.pop %v942
      %v944 = vrot.slane %v933, 4
      %v945 = vadd.f32 %v933, %v944
      %v946 = vrot.slane %v945, 2
      %v947 = vadd.f32 %v945, %v946
      %v948 = vrot.slane %v947, 1
      %v949 = vadd.f32 %v947, %v948
      %v950 = vrot.slane %v935, 4
      %v951 = vadd.f32 %v935, %v950
      %v952 = vrot.slane %v951, 2
      %v953 = vadd.f32 %v951, %v952
      %v954 = vrot.slane %v953, 1
      %v955 = vadd.f32 %v953, %v954
      %v956 = vrot.slane %v937, 4
      %v957 = vadd.f32 %v937, %v956
      %v958 = vrot.slane %v957, 2
      %v959 = vadd.f32 %v957, %v958
      %v960 = vrot.slane %v959, 1
      %v961 = vadd.f32 %v959, %v960
      %v962 = vrot.slane %v939, 4
      %v963 = vadd.f32 %v939, %v962
      %v964 = vrot.slane %v963, 2
      %v965 = vadd.f32 %v963, %v964
      %v966 = vrot.slane %v965, 1
      %v967 = vadd.f32 %v965, %v966
      %v968 = vrot.slane %v941, 4
      %v969 = vadd.f32 %v941, %v968
      %v970 = vrot.slane %v969, 2
      %v971 = vadd.f32 %v969, %v970
      %v972 = vrot.slane %v971, 1
      %v973 = vadd.f32 %v971, %v972
      %v974 = vrot.slane %v943, 4
      %v975 = vadd.f32 %v943, %v974
      %v976 = vrot.slane %v975, 2
      %v977 = vadd.f32 %v975, %v976
      %v978 = vrot.slane %v977, 1
      %v979 = vadd.f32 %v977, %v978
      %v980 = vrcp.pop %v949
      %v981 = vrcp.pop %v955
      %v982 = vrcp.pop %v961
      %v983 = vrcp.pop %v967
      %v984 = vrcp.pop %v973
      %v985 = vrcp.pop %v979
      %v986 = vmul.f32 %v949, %v980
      %v987 = vmul.f32 %v955, %v981
      %v988 = vmul.f32 %v961, %v982
      %v989 = vmul.f32 %v967, %v983
      %v990 = vmul.f32 %v973, %v984
      %v991 = vmul.f32 %v979, %v985
      %v992 = vsub.f32 2.0, %v986
      %v993 = vsub.f32 2.0, %v987
      %v994 = vsub.f32 2.0, %v988
      %v995 = vsub.f32 2.0, %v989
      %v996 = vsub.f32 2.0, %v990
      %v997 = vsub.f32 2.0, %v991
      %v998 = vmul.f32 %v980, %v992
      %v999 = vmul.f32 %v981, %v993
      %v1000 = vmul.f32 %v982, %v994
      %v1001 = vmul.f32 %v983, %v995
      %v1002 = vmul.f32 %v984, %v996
      %v1003 = vmul.f32 %v985, %v997
      %v1004 = vmul.f32 %v998, %v86
      %v1005 = vmul.f32 %v999, %v90
      %v1006 = vmul.f32 %v1000, %v94
      %v1007 = vmul.f32 %v1001, %v98
      %v1008 = vmul.f32 %v1002, %v102
      %v1009 = vmul.f32 %v1003, %v106
      %v1010 = vlaneseq
      %v1011 = vshrl.u32 %v1010, 7
      %v1012 = vsub.s32 0, %v1011
      %v1013 = vrot.slane %v1004, %v1012
      %v1014 = vlaneseq
      %v1015 = vshrl.u32 %v1014, 7
      %v1016 = vsub.s32 0, %v1015
      %v1017 = vrot.slane %v1005, %v1016
      %v1018 = vlaneseq
      %v1019 = vshrl.u32 %v1018, 7
      %v1020 = vsub.s32 0, %v1019
      %v1021 = vrot.slane %v1006, %v1020
      %v1022 = vlaneseq
      %v1023 = vshrl.u32 %v1022, 7
      %v1024 = vsub.s32 0, %v1023
      %v1025 = vrot.slane %v1007, %v1024
      %v1026 = vlaneseq
      %v1027 = vshrl.u32 %v1026, 7
      %v1028 = vsub.s32 0, %v1027
      %v1029 = vrot.slane %v1008, %v1028
      %v1030 = vlaneseq
      %v1031 = vshrl.u32 %v1030, 7
      %v1032 = vsub.s32 0, %v1031
      %v1033 = vrot.slane %v1009, %v1032
      %v1034 = vmul.f32 %v933, %v1013
      %v1035 = vmul.f32 %v935, %v1017
      %v1036 = vmul.f32 %v937, %v1021
      %v1037 = vmul.f32 %v939, %v1025
      %v1038 = vmul.f32 %v941, %v1029
      %v1039 = vmul.f32 %v943, %v1033
    $region38: #{tpu_custom_call.1} parent=1 // loop_footer
      %s124 = sadd.s32 1, %s120
    $region39: #{tpu_custom_call.1} parent=1 // loop_footer_branch
      %119 = sbr.rel target = $region35
    $region40: #{tpu_custom_call.1} parent=1 // loop_exit
      _
    %1040 = vst [vmem:[#allocation8] sm:$0xff] %v125
    %1041 = vst [vmem:[#allocation8 + $0x8] sm:$0xff] %v126
    %1042 = vst [vmem:[#allocation8 + $0x10] sm:$0xff] %v127
    %1043 = vst [vmem:[#allocation8 + $0x18] sm:$0xff] %v128
    %1044 = vst [vmem:[#allocation8 + $0x20] sm:$0xff] %v129
    %1045 = vst [vmem:[#allocation8 + $0x28] sm:$0xff] %v130
    // Predicated region
    $region41: #{tpu_custom_call.1} parent=1 // pred_check
      _
    $region42: #{tpu_custom_call.1} parent=1 // pred_check_branch
      %1047 = sbr.rel (0) target = $region44
    $region43: #{tpu_custom_call.1} parent=1 // pred_region
      %s1049 = ssub.s32 768, 768
      %1050 = vsyncadd [#allocation5], %s1049
      %s1052 = sshll.u32 [#allocation8], 4
      %s1053 = int_to_ptr.vmem [resolvable:$true] %s1052
      %1055 = dma.vmem_to_hbm [thread:$0]  %s1053, 768, %s6, [#allocation5]
    $region44: #{tpu_custom_call.1} parent=1 // pred_fallthru
      _
    // Predicated region
    $region45: #{tpu_custom_call.1} parent=1 // pred_check
      _
    $region46: #{tpu_custom_call.1} parent=1 // pred_check_branch
      %1057 = sbr.rel (0) target = $region48
    $region47: #{tpu_custom_call.1} parent=1 // pred_region
      %1058 = dma.done [#allocation5], 768
    $region48: #{tpu_custom_call.1} parent=1 // pred_fallthru
      _
    %1059 = vsyncpa [#allocation4], 1
    %1060 = vsyncpa [#allocation7], 1
    %1061 = vsyncpa [#allocation5], 1

</llo_original>
